<compile_context>
chip_gen: v5e
topology: v5e:2x2
jax: 0.10.0
libtpu: 0.0.40
codegen_flags: <defaults>
</compile_context>

<pallas_src>
import jax
import jax.numpy as jnp
from jax.experimental import pallas as pl
from jax.experimental.pallas import tpu as pltpu


def _round_up(a, b):
    return -(-a // b) * b


def _vmem_limit_bytes():
    """Scoped-VMEM request: ~3/4 of physical VMEM, capped, safe fallback."""
    cap = 0
    try:
        cap = int(getattr(pltpu.get_tpu_info(), "vmem_capacity_bytes", 0))
    except Exception:
        cap = 0
    if cap <= 0:
        return 32 * 1024 * 1024  # conservative, known-good everywhere
    return min((cap * 3) // 4, 96 * 1024 * 1024)


def _choose_tb(bc, tb_max):
    """Rows per block: multiple of 8 (or == bc), preferring a divisor of bc."""
    if bc <= tb_max:
        return bc
    tb_max8 = (tb_max // 8) * 8
    if tb_max8 >= 8:
        if bc % 8 == 0:
            d = tb_max8
            while d >= 8:
                if bc % d == 0:
                    return d          # divides bc -> no tail mask needed
                d -= 8
        return tb_max8                # tail rows get zero-masked
    # TODO(synk): for planes too large for even 8 rows per block, add a second
    # grid axis over the flattened column dim (one-element seam per plane).
    return min(8, bc)


def _make_tv_kernel(bc, tb, h, w):
    """Builds the per-block TV partial-sum kernel (closure over static sizes)."""
    hw = h * w
    need_tail_mask = (bc % tb) != 0
    use_roll = (hw % 128 == 0)

    def kernel(x_ref, masks_ref, out_ref):
        # Cast AFTER the VMEM load so HBM traffic stays in the native dtype.
        x = x_ref[...].astype(jnp.float32)

        if need_tail_mask:
            # Zero planes past the real end of the B*C axis; diffs are strictly
            # per-row, so zeroed rows contribute exactly 0.
            base = pl.program_id(0) * tb
            rows = base + jax.lax.broadcasted_iota(jnp.int32, (tb, 1), 0)
            x = jnp.where(rows < bc, x, 0.0)

        h_mask = masks_ref[0:1, :]   # (1, hw): 1.0 where col <  (h-1)*w
        w_mask = masks_ref[1:2, :]   # (1, hw): 1.0 where col %  w != w-1

        if use_roll:
            # Lane-aligned neighbors via XLU roll; the wrap-around positions
            # are exactly the masked-out seams, so shapes stay (tb, hw).
            x_c = pltpu.roll(x, hw - 1, axis=1)   # x[col + 1 (mod hw)]
            x_r = pltpu.roll(x, hw - w, axis=1)   # x[col + w (mod hw)]
            dh = (x_r - x) * h_mask               # vertical differences
            dw = (x_c - x) * w_mask               # horizontal differences
            out_ref[0, 0] = jnp.sum(dh * dh)
            out_ref[0, 1] = jnp.sum(dw * dw)
        else:
            # Fallback when H*W is not a multiple of 128 (lowering robustness).
            dh = x[:, w:] - x[:, :-w]                        # all positions valid
            dw = (x[:, 1:] - x[:, :-1]) * w_mask[:, : hw - 1]
            out_ref[0, 0] = jnp.sum(dh * dh)
            out_ref[0, 1] = jnp.sum(dw * dw)

    return kernel


def l_tv(x, tv_loss_weight=1.0):
    """JAX/Pallas equivalent of L_TV.forward(x) for NCHW input x."""
    b, c, h, w = x.shape
    bc = b * c
    hw = h * w
    count_h = (h - 1) * w
    count_w = h * (w - 1)

    # Lane-dense, copy-free view: one plane per row, contiguous along lanes.
    x_flat = x.reshape(bc, hw)

    # 0/1 seam masks (computed once on-device, tiny, fetched into VMEM once).
    col = jnp.arange(hw, dtype=jnp.int32)
    h_mask = (col < (h - 1) * w).astype(jnp.float32)      # valid vertical diff
    w_mask = ((col % w) != (w - 1)).astype(jnp.float32)   # valid horizontal diff
    masks = jnp.stack([h_mask, w_mask], axis=0)           # (2, hw) f32

    # --- block sizing (accounts for lane padding + f32 intermediates) -------
    itemsize = jnp.dtype(x.dtype).itemsize
    padded_cols = _round_up(hw, 128)
    # Per block-row: double-buffered native input + ~4 f32 intermediates.
    per_row = padded_cols * (2 * itemsize + 4 * 4)
    vmem_limit = _vmem_limit_bytes()
    budget = max(per_row, vmem_limit - 4 * 1024 * 1024)   # headroom for scratch
    tb = _choose_tb(bc, budget // per_row)

    # Megacore (v7x): keep the "parallel" grid at >= 2 blocks when bc allows.
    if bc >= 16:
        half8 = _round_up(-(-bc // 2), 8)
        tb = min(tb, half8)

    num_blocks = -(-bc // tb)

    partials = pl.pallas_call(
        _make_tv_kernel(bc, tb, h, w),
        out_shape=jax.ShapeDtypeStruct((num_blocks, 2), jnp.float32),
        grid_spec=pltpu.PrefetchScalarGridSpec(
            num_scalar_prefetch=0,
            grid=(num_blocks,),
            in_specs=[
                pl.BlockSpec((tb, hw), lambda i: (i, 0)),
                pl.BlockSpec((2, hw), lambda i: (0, 0)),
            ],
            out_specs=pl.BlockSpec(
                (1, 2), lambda i: (i, 0), memory_space=pltpu.SMEM
            ),
        ),
        compiler_params=pltpu.CompilerParams(
            # Per-block partial sums -> no cross-step accumulator, so the grid
            # axis is safely "parallel" (uses both TensorCores on v7x).
            dimension_semantics=("parallel",),
            vmem_limit_bytes=int(vmem_limit),
        ),
        cost_estimate=pl.CostEstimate(
            flops=6 * bc * hw,
            transcendentals=0,
            bytes_accessed=int(bc * hw * itemsize + masks.size * 4
                               + num_blocks * 2 * 4),
        ),
    )(x_flat, masks)

    h_tv = jnp.sum(partials[:, 0])
    w_tv = jnp.sum(partials[:, 1])
    return tv_loss_weight * 2.0 * (h_tv / count_h + w_tv / count_w) / b


def _l_tv_ref(x, tv_loss_weight=1.0):
    b, _, h, w = x.shape
    count_h = (h - 1) * w
    count_w = h * (w - 1)
    xf = x.astype(jnp.float32)
    h_tv = jnp.sum((xf[:, :, 1:, :] - xf[:, :, :-1, :]) ** 2)
    w_tv = jnp.sum((xf[:, :, :, 1:] - xf[:, :, :, :-1]) ** 2)
    return tv_loss_weight * 2.0 * (h_tv / count_h + w_tv / count_w) / b


if __name__ == "__main__":
    key = jax.random.PRNGKey(0)
    k0, k1, k2 = jax.random.split(key, 3)

    # Primary shape from the module spec (single block, roll path).
    x0 = jax.random.normal(k0, (2, 4, 16, 16), dtype=jnp.float32)  # NCHW
    out0 = jax.block_until_ready(l_tv(x0, tv_loss_weight=1.0))
    ref0 = jax.block_until_ready(_l_tv_ref(x0, tv_loss_weight=1.0))
    assert jnp.allclose(out0, ref0, rtol=1e-5, atol=1e-6), (out0, ref0)

    # Multi-block "parallel" grid (bc=32 -> 2 blocks of 16 planes).
    x1 = jax.random.normal(k1, (4, 8, 16, 16), dtype=jnp.float32)
    out1 = jax.block_until_ready(l_tv(x1, tv_loss_weight=1.0))
    ref1 = jax.block_until_ready(_l_tv_ref(x1, tv_loss_weight=1.0))
    assert jnp.allclose(out1, ref1, rtol=1e-5, atol=1e-6), (out1, ref1)

    # Native bf16 input stays bf16 in HBM; cast to f32 happens after the load.
    x2 = jax.random.normal(k2, (2, 4, 16, 16), dtype=jnp.bfloat16)
    out2 = jax.block_until_ready(l_tv(x2, tv_loss_weight=0.5))
    ref2 = jax.block_until_ready(_l_tv_ref(x2, tv_loss_weight=0.5))
    assert jnp.allclose(out2, ref2, rtol=1e-4, atol=1e-5), (out2, ref2)

    print("KERNEL_OK")
</pallas_src>

<mosaic_0001>
module attributes {stable_mosaic.version = 11 : i64} {
  func.func @kernel(%arg0: i32, %arg1: memref<8x256xf32, #tpu.memory_space<vmem>>, %arg2: memref<2x256xf32, #tpu.memory_space<vmem>>, %arg3: memref<1x2xf32, #tpu.memory_space<smem>>) attributes {dimension_semantics = [#tpu.dimension_semantics<parallel>], iteration_bounds = array<i64: 1>, scalar_prefetch = 0 : i64, scratch_operands = 0 : i64, tpu.core_type = #tpu.core_type<tc>, window_params = [{transform_indices = @transform_0, window_bounds = array<i64: 8, 256>}, {pipeline_mode = #tpu.pipeline_mode<synchronous>, transform_indices = @transform_1, window_bounds = array<i64: 2, 256>}, {transform_indices = @transform_2, window_bounds = array<i64: 1, 2>}]} {
    %c0 = arith.constant 0 : index
    %c0_0 = arith.constant 0 : index
    %0 = vector.load %arg1[%c0, %c0_0] : memref<8x256xf32, #tpu.memory_space<vmem>>, vector<8x256xf32>
    %c0_1 = arith.constant 0 : index
    %c0_2 = arith.constant 0 : index
    %1 = vector.load %arg2[%c0_1, %c0_2] : memref<2x256xf32, #tpu.memory_space<vmem>>, vector<1x256xf32>
    %c1 = arith.constant 1 : index
    %c0_3 = arith.constant 0 : index
    %2 = vector.load %arg2[%c1, %c0_3] : memref<2x256xf32, #tpu.memory_space<vmem>>, vector<1x256xf32>
    %c255_i32 = arith.constant 255 : i32
    %3 = tpu.dynamic_rotate %0 by %c255_i32 dim 1 : vector<8x256xf32>, i32 -> vector<8x256xf32>
    %c240_i32 = arith.constant 240 : i32
    %4 = tpu.dynamic_rotate %0 by %c240_i32 dim 1 : vector<8x256xf32>, i32 -> vector<8x256xf32>
    %5 = arith.subf %4, %0 : vector<8x256xf32>
    %6 = vector.broadcast %1 : vector<1x256xf32> to vector<8x256xf32>
    %7 = arith.mulf %5, %6 : vector<8x256xf32>
    %8 = arith.subf %3, %0 : vector<8x256xf32>
    %9 = vector.broadcast %2 : vector<1x256xf32> to vector<8x256xf32>
    %10 = arith.mulf %8, %9 : vector<8x256xf32>
    %11 = arith.mulf %7, %7 : vector<8x256xf32>
    %12 = vector.shape_cast %11 : vector<8x256xf32> to vector<1x8x256xf32>
    %cst = arith.constant dense<0.000000e+00> : vector<1xf32>
    %13 = vector.multi_reduction <add>, %12, %cst [1, 2] : vector<1x8x256xf32> to vector<1xf32>
    %14 = vector.shape_cast %13 : vector<1xf32> to vector<1x1x1xf32>
    %15 = vector.extract %14[0, 0, 0] : f32 from vector<1x1x1xf32>
    %c0_4 = arith.constant 0 : index
    %c0_5 = arith.constant 0 : index
    %16 = memref.load %arg3[%c0_4, %c0_5] : memref<1x2xf32, #tpu.memory_space<smem>>
    memref.store %15, %arg3[%c0_4, %c0_5] : memref<1x2xf32, #tpu.memory_space<smem>>
    %17 = arith.mulf %10, %10 : vector<8x256xf32>
    %18 = vector.shape_cast %17 : vector<8x256xf32> to vector<1x8x256xf32>
    %cst_6 = arith.constant dense<0.000000e+00> : vector<1xf32>
    %19 = vector.multi_reduction <add>, %18, %cst_6 [1, 2] : vector<1x8x256xf32> to vector<1xf32>
    %20 = vector.shape_cast %19 : vector<1xf32> to vector<1x1x1xf32>
    %21 = vector.extract %20[0, 0, 0] : f32 from vector<1x1x1xf32>
    %c0_7 = arith.constant 0 : index
    %c1_8 = arith.constant 1 : index
    %22 = memref.load %arg3[%c0_7, %c1_8] : memref<1x2xf32, #tpu.memory_space<smem>>
    memref.store %21, %arg3[%c0_7, %c1_8] : memref<1x2xf32, #tpu.memory_space<smem>>
    return
  }
  func.func @transform_0(%arg0: i32) -> (i32, i32) {
    %c0_i32 = arith.constant 0 : i32
    %c0_i32_0 = arith.constant 0 : i32
    return %arg0, %c0_i32 : i32, i32
  }
  func.func @transform_1(%arg0: i32) -> (i32, i32) {
    %c0_i32 = arith.constant 0 : i32
    %c0_i32_0 = arith.constant 0 : i32
    %c0_i32_1 = arith.constant 0 : i32
    return %c0_i32, %c0_i32_0 : i32, i32
  }
  func.func @transform_2(%arg0: i32) -> (i32, i32) {
    %c0_i32 = arith.constant 0 : i32
    %c0_i32_0 = arith.constant 0 : i32
    return %arg0, %c0_i32 : i32, i32
  }
}

</mosaic_0001>

<llo_original>
// kernel: tpu_custom_call.1
$region0: #{tpu_custom_call.1}
  #allocation0 [shape = 'u32[]', space=smem, size = 0x4, offset = 0x4, fixed_abs, tag = 'smem constant byte address 0x4 - core index']
  #allocation1 [shape = 'u32[72,128]{1,0:T(1,128)}', space=vmem, size = 0x9000, scoped, tag = 'internal scratch']
  %s0 = inlined_call_operand.hbm [shape: f32[8,256], index: 0, kind: input, shape index: {}]
  %s1 = inlined_call_operand.hbm [shape: f32[2,256], index: 1, kind: input, shape index: {}]
  %s2 = inlined_call_operand.hbm [shape: f32[1,2], index: 2, kind: output, shape index: {}]
  %s3 = sld [smem:[#allocation0]]
  $region26: #{tpu_custom_call.1} parent=0
    _
  %s5 = ssub.s32 1, %s3
  %s6 = scalar_select 0, %s5, %s3
  $region1: #{tpu_custom_call.1} parent=0
    #allocation2 [shape = 'u8[8192]{0}', space=vmem, size = 0x2000, scoped, tag = 'input window, operand 0, single buffered']
    #allocation3 [shape = 's32[1]{0}', space=sflag, size = 0x4, scoped, tag = 'scoped memory for tpu_custom_call.1']
    #allocation4 [shape = 's32[1]{0}', space=sflag, size = 0x4, scoped, tag = 'scoped memory for tpu_custom_call.1']
    #allocation5 [shape = 'u8[2048]{0}', space=vmem, size = 0x800, scoped, tag = 'input window, operand 1, single buffered']
    #allocation6 [shape = 's32[1]{0}', space=sflag, size = 0x4, scoped, tag = 'scoped memory for tpu_custom_call.1']
    #allocation7 [shape = 'u8[512]{0}', space=smem, size = 0x200, scoped, tag = 'output window, operand 0, single buffered']
    %7 = vsyncpa [#allocation3], 0
    %8 = vsyncpa [#allocation6], 0
    %9 = vsyncpa [#allocation4], 0
    // Predicated region
    $region2: #{tpu_custom_call.1} parent=1 // pred_check
      _
    $region3: #{tpu_custom_call.1} parent=1 // pred_check_branch
      %11 = sbr.rel (0) target = $region5
    $region4: #{tpu_custom_call.1} parent=1 // pred_region
      %13 = vsyncadd [#allocation3], 0
      %s15 = sshll.u32 %s0, 4
      %s16 = int_to_ptr.hbm [resolvable:$true] %s15
      %s17 = sshll.u32 [#allocation2], 4
      %s18 = int_to_ptr.vmem [resolvable:$true] %s17
      %20 = dma.hbm_to_vmem [thread:$0]  %s16, 256, %s18, [#allocation3]
    $region5: #{tpu_custom_call.1} parent=1 // pred_fallthru
      _
    // Predicated region
    $region6: #{tpu_custom_call.1} parent=1 // pred_check
      _
    $region7: #{tpu_custom_call.1} parent=1 // pred_check_branch
      %22 = sbr.rel (0) target = $region9
    $region8: #{tpu_custom_call.1} parent=1 // pred_region
      %24 = vsyncadd [#allocation6], 0
      %s26 = sshll.u32 %s1, 4
      %s27 = int_to_ptr.hbm [resolvable:$true] %s26
      %s28 = sshll.u32 [#allocation5], 4
      %s29 = int_to_ptr.vmem [resolvable:$true] %s28
      %31 = dma.hbm_to_vmem [thread:$0]  %s27, 64, %s29, [#allocation6]
    $region9: #{tpu_custom_call.1} parent=1 // pred_fallthru
      _
    // Predicated region
    $region10: #{tpu_custom_call.1} parent=1 // pred_check
      _
    $region11: #{tpu_custom_call.1} parent=1 // pred_check_branch
      %33 = sbr.rel (0) target = $region13
    $region12: #{tpu_custom_call.1} parent=1 // pred_region
      %35 = dma.done [#allocation3], 256
    $region13: #{tpu_custom_call.1} parent=1 // pred_fallthru
      _
    // Predicated region
    $region14: #{tpu_custom_call.1} parent=1 // pred_check
      _
    $region15: #{tpu_custom_call.1} parent=1 // pred_check_branch
      %37 = sbr.rel (0) target = $region17
    $region16: #{tpu_custom_call.1} parent=1 // pred_region
      %39 = dma.done [#allocation6], 64
    $region17: #{tpu_custom_call.1} parent=1 // pred_fallthru
      _
    %v40 = vld [vmem:[#allocation2] sm:$0xff]
    %v41 = vld [vmem:[#allocation2 + $0x8] sm:$0xff]
    %v42 = vld [vmem:[#allocation5] ss:$2 sm:$0x3]
    %s43 = scalar_lea.vmem [#allocation5], 1
    %v44 = vld [vmem:[%s43] ss:$2 sm:$0x3]
    %45 = vrot.lane.b32.xlu0 %v40, 127
    %v46 = vpop.permute.xlu0 %45
    %47 = vrot.lane.b32.xlu0 %v41, 127
    %v48 = vpop.permute.xlu0 %47
    %v49 = vlaneseq
    %v50 = vand.u32 %v49, 127
    %vm51 = vcmp.lt.s32.totalorder %v50, 127
    %v52 = vsel %vm51, %v46, %v48
    %v53 = vsel %vm51, %v48, %v46
    %54 = vrot.lane.b32.xlu0 %v40, 112
    %v55 = vpop.permute.xlu0 %54
    %56 = vrot.lane.b32.xlu0 %v41, 112
    %v57 = vpop.permute.xlu0 %56
    %vm58 = vcmp.lt.s32.totalorder %v50, 112
    %v59 = vsel %vm58, %v55, %v57
    %v60 = vsel %vm58, %v57, %v55
    %v61 = vsub.f32 %v59, %v40
    %v62 = vsub.f32 %v60, %v41
    %v64 = vperm.slane %v42, 0
    %v65 = vperm.slane %v42, 1
    %v68 = vmul.f32 %v61, %v64
    %v69 = vmul.f32 %v62, %v65
    %v70 = vsub.f32 %v52, %v40
    %v71 = vsub.f32 %v53, %v41
    %v73 = vperm.slane %v44, 0
    %v74 = vperm.slane %v44, 1
    %v77 = vmul.f32 %v70, %v73
    %v78 = vmul.f32 %v71, %v74
    %v79 = vmul.f32 %v68, %v68
    %v80 = vmul.f32 %v69, %v69
    %v81 = vadd.f32 %v79, %v80
    %82 = vadd.xlane.f32.xlu0 %v81
    %v83 = vpop.xlane.xlu0 %82
    %v84 = vrot.slane %v83, 4
    %v85 = vadd.f32 %v83, %v84
    %v86 = vrot.slane %v85, 2
    %v87 = vadd.f32 %v85, %v86
    %v88 = vrot.slane %v87, 1
    %v89 = vadd.f32 %v87, %v88
    %s90 = vtos %v89
    %s91 = scalar_lea.smem [#allocation7], 0
    %92 = sst [smem:[%s91]] %s90
    %v93 = vmul.f32 %v77, %v77
    %v94 = vmul.f32 %v78, %v78
    %v95 = vadd.f32 %v93, %v94
    %96 = vadd.xlane.f32.xlu0 %v95
    %v97 = vpop.xlane.xlu0 %96
    %v98 = vrot.slane %v97, 4
    %v99 = vadd.f32 %v97, %v98
    %v100 = vrot.slane %v99, 2
    %v101 = vadd.f32 %v99, %v100
    %v102 = vrot.slane %v101, 1
    %v103 = vadd.f32 %v101, %v102
    %s104 = vtos %v103
    %s105 = scalar_lea.smem [#allocation7], 1
    %106 = sst [smem:[%s105]] %s104
    // Predicated region
    $region18: #{tpu_custom_call.1} parent=1 // pred_check
      _
    $region19: #{tpu_custom_call.1} parent=1 // pred_check_branch
      %108 = sbr.rel (0) target = $region21
    $region20: #{tpu_custom_call.1} parent=1 // pred_region
      %110 = vsyncadd [#allocation4], 0
      %s112 = sshll.u32 %s2, 4
      %s113 = int_to_ptr.hbm [resolvable:$true] %s112
      %115 = dma.smem_to_hbm [#allocation7], 16, %s113, [#allocation4]
    $region21: #{tpu_custom_call.1} parent=1 // pred_fallthru
      _
    // Predicated region
    $region22: #{tpu_custom_call.1} parent=1 // pred_check
      _
    $region23: #{tpu_custom_call.1} parent=1 // pred_check_branch
      %117 = sbr.rel (0) target = $region25
    $region24: #{tpu_custom_call.1} parent=1 // pred_region
      %119 = dma.done [#allocation4], 16
    $region25: #{tpu_custom_call.1} parent=1 // pred_fallthru
      _
    %120 = sfence
    %121 = vsyncpa [#allocation3], 1
    %122 = vsyncpa [#allocation6], 1
    %123 = vsyncpa [#allocation4], 1

</llo_original>
